<compile_context>
chip_gen: v5e
topology: v5e:2x2
jax: 0.10.0
libtpu: 0.0.40
codegen_flags: <defaults>
</compile_context>

<pallas_src>
import functools

import jax
import jax.numpy as jnp
from jax.experimental import pallas as pl
from jax.experimental.pallas import tpu as pltpu

# MXU operand dtype (cast at the kernel boundary, NOT in the stored params).
# Accumulation and gate/state elementwise math remain f32.
MATMUL_DTYPE = jnp.bfloat16


# ----------------------------------------------------------------------------
# Fused kernel: LSTM recurrence (last hidden state) + MLP classifier
# ----------------------------------------------------------------------------
def fused_lstm_mlp_kernel(
    x_ref, wx_ref, wh_ref, b_ref,
    w1_ref, b1_ref, w2_ref, b2_ref, w3_ref, b3_ref,
    out_ref, *, batch, seq_len, hidden):
    B, S, H = batch, seq_len, hidden

    # Input projection for ALL timesteps at once (off the serial path).
    # x is TIME-MAJOR: rows [t*B, (t+1)*B) hold timestep t for all batch rows,
    # so the per-step read inside the recurrence is a contiguous sublane slice.
    # LSTM bias (b_ih + b_hh) is folded in here exactly once.
    x_all = x_ref[...]                                        # (S*B, I) f32
    xp = (
        jnp.dot(x_all.astype(MATMUL_DTYPE), wx_ref[...],
                preferred_element_type=jnp.float32)
        + b_ref[...]
    )                                                         # (S*B, 4H) f32, gate order [i,f,o,g]

    wh = wh_ref[...]                                          # (H, 4H) bf16, gate order [i,f,o,g]

    h = jnp.zeros((B, H), jnp.float32)
    c = jnp.zeros((B, H), jnp.float32)

    # Static unroll: S is small & fixed and the recurrence is inherently serial,
    # so give the scheduler the full dependency chain. Per step: ONE MXU matmul
    # (h @ W_hh^T), ONE sigmoid over [i|f|o] and ONE tanh over [g] on the EUP.
    for t in range(S):
        xp_t = xp[t * B:(t + 1) * B, :]                       # contiguous (B, 4H)
        gates = xp_t + jnp.dot(h.astype(MATMUL_DTYPE), wh,
                               preferred_element_type=jnp.float32)  # (B, 4H) f32
        sig = jax.nn.sigmoid(gates[:, : 3 * H])               # i | f | o
        g_g = jnp.tanh(gates[:, 3 * H:])                      # g
        i_g = sig[:, :H]
        f_g = sig[:, H:2 * H]
        o_g = sig[:, 2 * H:]
        c = f_g * c + i_g * g_g
        h = o_g * jnp.tanh(c)

    # Classifier MLP fused in (Dropout = identity at inference).
    a = jnp.dot(h.astype(MATMUL_DTYPE), w1_ref[...],
                preferred_element_type=jnp.float32) + b1_ref[...]
    a = jnp.maximum(a, 0.0)
    a = jnp.dot(a.astype(MATMUL_DTYPE), w2_ref[...],
                preferred_element_type=jnp.float32) + b2_ref[...]
    a = jnp.maximum(a, 0.0)
    out = jnp.dot(a.astype(MATMUL_DTYPE), w3_ref[...],
                  preferred_element_type=jnp.float32) + b3_ref[...]   # (B, 128) lane-dense
    out_ref[...] = out.astype(out_ref.dtype)


# ----------------------------------------------------------------------------
# Wrapper
# ----------------------------------------------------------------------------
def lstm_model_forward(x, cparams, *, num_classes):
    """x: (batch, seq, input_size) -- batch_first, matching the PyTorch module.

    cparams: output of prepare_compute_params (bf16 weights, f32 biases,
    lane-padded classifier head)."""
    B, S, I = x.shape
    H = cparams["wh"].shape[0]
    C_pad = cparams["w3"].shape[1]

    # One-time time-major relayout (tiny, off the serial recurrence path).
    x_tm = jnp.transpose(x, (1, 0, 2)).reshape(S * B, I)

    kernel = functools.partial(fused_lstm_mlp_kernel, batch=B, seq_len=S, hidden=H)
    vmem = lambda: pl.BlockSpec(memory_space=pltpu.MemorySpace.VMEM)

    out_pad = pl.pallas_call(
        kernel,
        out_shape=jax.ShapeDtypeStruct((B, C_pad), jnp.float32),
        in_specs=[vmem() for _ in range(10)],
        out_specs=vmem(),
        compiler_params=pltpu.CompilerParams(vmem_limit_bytes=16 * 1024 * 1024),
    )(
        x_tm,
        cparams["wx"], cparams["wh"], cparams["b_lstm"],
        cparams["w1"], cparams["b1"],
        cparams["w2"], cparams["b2"],
        cparams["w3"], cparams["b3"],
    )
    return out_pad[:, :num_classes]


# ----------------------------------------------------------------------------
# Parameter init (PyTorch layout / init) + one-time compute-param preparation
# ----------------------------------------------------------------------------
def init_params(key, input_size, hidden_dim, num_classes):
    """PyTorch-layout f32 parameters (nn.LSTM gate order [i,f,g,o], Linear (out,in))."""
    H = hidden_dim
    ks = jax.random.split(key, 10)
    u = lambda k, shape, s: jax.random.uniform(k, shape, jnp.float32, -s, s)

    s_lstm = 1.0 / jnp.sqrt(H)
    params = {
        "w_ih": u(ks[0], (4 * H, input_size), s_lstm),
        "w_hh": u(ks[1], (4 * H, H), s_lstm),
        "b_ih": u(ks[2], (4 * H,), s_lstm),
        "b_hh": u(ks[3], (4 * H,), s_lstm),
    }

    def linear(kw, kb, fan_in, fan_out):
        s = 1.0 / jnp.sqrt(fan_in)
        return u(kw, (fan_out, fan_in), s), u(kb, (fan_out,), s)

    params["w1"], params["b1"] = linear(ks[4], ks[5], hidden_dim, 256)
    params["w2"], params["b2"] = linear(ks[6], ks[7], 256, 256)
    params["w3"], params["b3"] = linear(ks[8], ks[9], 256, num_classes)
    return params


def prepare_compute_params(params, num_classes, lane=128):
    """One-time: transpose to (fan_in, fan_out), reorder LSTM gate columns
    [i,f,g,o]->[i,f,o,g], fold the two LSTM biases, cast matmul weights to bf16
    (kernel boundary; stored params stay f32), and zero-pad the classifier head
    to a lane-dense 128-wide output."""
    H = params["w_hh"].shape[1]

    def reorder_ifgo_to_ifog(w_t):
        # column blocks [i | f | g | o] -> [i | f | o | g]
        return jnp.concatenate(
            [w_t[:, : 2 * H], w_t[:, 3 * H:], w_t[:, 2 * H: 3 * H]], axis=1)

    b_lstm = reorder_ifgo_to_ifog(
        (params["b_ih"] + params["b_hh"]).reshape(1, -1)).astype(jnp.float32)

    c_pad = max(lane, -(-num_classes // lane) * lane)
    w3_t = params["w3"].T                                           # (256, C)
    w3p = jnp.zeros((w3_t.shape[0], c_pad), jnp.float32).at[:, :num_classes].set(w3_t)
    b3p = jnp.zeros((1, c_pad), jnp.float32).at[:, :num_classes].set(
        params["b3"][None, :])

    return {
        "wx": reorder_ifgo_to_ifog(params["w_ih"].T).astype(MATMUL_DTYPE),   # (I, 4H)
        "wh": reorder_ifgo_to_ifog(params["w_hh"].T).astype(MATMUL_DTYPE),   # (H, 4H)
        "b_lstm": b_lstm,                                                    # (1, 4H) f32
        "w1": params["w1"].T.astype(MATMUL_DTYPE),
        "b1": params["b1"][None, :].astype(jnp.float32),
        "w2": params["w2"].T.astype(MATMUL_DTYPE),
        "b2": params["b2"][None, :].astype(jnp.float32),
        "w3": w3p.astype(MATMUL_DTYPE),                                      # (256, 128)
        "b3": b3p,                                                           # (1, 128) f32
    }


# ----------------------------------------------------------------------------
# Pure-JAX reference (PyTorch gate order), same bf16-operand matmul policy
# ----------------------------------------------------------------------------
def ref_forward(x, params):
    B, S, I = x.shape
    H = params["w_hh"].shape[1]

    def mm(a, w_pt):   # a @ w_pt.T with PyTorch (out,in) weight; bf16 ops, f32 accum
        return jnp.dot(a.astype(MATMUL_DTYPE), w_pt.T.astype(MATMUL_DTYPE),
                       preferred_element_type=jnp.float32)

    b = (params["b_ih"] + params["b_hh"]).astype(jnp.float32)
    xp = (mm(x.reshape(B * S, I), params["w_ih"]) + b).reshape(B, S, 4 * H)

    h = jnp.zeros((B, H), jnp.float32)
    c = jnp.zeros((B, H), jnp.float32)
    for t in range(S):
        g4 = xp[:, t, :] + mm(h, params["w_hh"])          # PyTorch order [i, f, g, o]
        i_g = jax.nn.sigmoid(g4[:, :H])
        f_g = jax.nn.sigmoid(g4[:, H:2 * H])
        g_g = jnp.tanh(g4[:, 2 * H:3 * H])
        o_g = jax.nn.sigmoid(g4[:, 3 * H:])
        c = f_g * c + i_g * g_g
        h = o_g * jnp.tanh(c)

    a = jnp.maximum(mm(h, params["w1"]) + params["b1"], 0.0)
    a = jnp.maximum(mm(a, params["w2"]) + params["b2"], 0.0)
    return mm(a, params["w3"]) + params["b3"]


if __name__ == "__main__":
    batch = 2
    seq_len = 8
    input_size = 16
    hidden_dim = 32
    num_classes = 10

    key = jax.random.PRNGKey(0)
    k_x, k_p = jax.random.split(key)
    x = jax.random.normal(k_x, (batch, seq_len, input_size), dtype=jnp.float32)

    params = init_params(k_p, input_size, hidden_dim, num_classes)          # f32, PyTorch layout
    cparams = prepare_compute_params(params, num_classes)                   # one-time bf16 cast + pad

    fwd = jax.jit(functools.partial(lstm_model_forward, num_classes=num_classes))
    out = jax.block_until_ready(fwd(x, cparams))

    assert out.shape == (batch, num_classes)
    assert bool(jnp.all(jnp.isfinite(out)))

    # Validate gate ordering / recurrence numerically against the PyTorch-order
    # reference (same bf16-weight, f32-accumulate matmul policy -> tight tolerance).
    ref = ref_forward(x, params)
    max_err = float(jnp.max(jnp.abs(out - ref)))
    assert jnp.allclose(out, ref, atol=5e-3, rtol=1e-2), f"max_err={max_err}"

    print("KERNEL_OK")
</pallas_src>

<mosaic_0001>
module attributes {stable_mosaic.version = 11 : i64} {
  func.func @fused_lstm_mlp_kernel(%arg0: memref<16x16xf32, #tpu.memory_space<vmem>>, %arg1: memref<16x128xbf16, #tpu.memory_space<vmem>>, %arg2: memref<32x128xbf16, #tpu.memory_space<vmem>>, %arg3: memref<1x128xf32, #tpu.memory_space<vmem>>, %arg4: memref<32x256xbf16, #tpu.memory_space<vmem>>, %arg5: memref<1x256xf32, #tpu.memory_space<vmem>>, %arg6: memref<256x256xbf16, #tpu.memory_space<vmem>>, %arg7: memref<1x256xf32, #tpu.memory_space<vmem>>, %arg8: memref<256x128xbf16, #tpu.memory_space<vmem>>, %arg9: memref<1x128xf32, #tpu.memory_space<vmem>>, %arg10: memref<2x128xf32, #tpu.memory_space<vmem>>) attributes {dimension_semantics = [], scalar_prefetch = 0 : i64, scratch_operands = 0 : i64, tpu.core_type = #tpu.core_type<tc>} {
    %c0 = arith.constant 0 : index
    %c0_0 = arith.constant 0 : index
    %0 = vector.load %arg0[%c0, %c0_0] : memref<16x16xf32, #tpu.memory_space<vmem>>, vector<16x16xf32>
    %1 = arith.truncf %0 : vector<16x16xf32> to vector<16x16xbf16>
    %c0_1 = arith.constant 0 : index
    %c0_2 = arith.constant 0 : index
    %2 = vector.load %arg1[%c0_1, %c0_2] : memref<16x128xbf16, #tpu.memory_space<vmem>>, vector<16x128xbf16>
    %cst = arith.constant dense<0.000000e+00> : vector<16x128xf32>
    %3 = tpu.matmul %1, %2, %cst {dimension_numbers = #tpu.dot_dimension_numbers<[1], [0], [0], [1], [0, 0, 1, 1], [], []>} : vector<16x16xbf16>, vector<16x128xbf16>, vector<16x128xf32> -> vector<16x128xf32>
    %c0_3 = arith.constant 0 : index
    %c0_4 = arith.constant 0 : index
    %4 = vector.load %arg3[%c0_3, %c0_4] : memref<1x128xf32, #tpu.memory_space<vmem>>, vector<1x128xf32>
    %5 = vector.broadcast %4 : vector<1x128xf32> to vector<16x128xf32>
    %6 = arith.addf %3, %5 : vector<16x128xf32>
    %c0_5 = arith.constant 0 : index
    %c0_6 = arith.constant 0 : index
    %7 = vector.load %arg2[%c0_5, %c0_6] : memref<32x128xbf16, #tpu.memory_space<vmem>>, vector<32x128xbf16>
    %cst_7 = arith.constant 0.000000e+00 : f32
    %8 = vector.broadcast %cst_7 : f32 to vector<2x32xf32>
    %cst_8 = arith.constant 0.000000e+00 : f32
    %9 = vector.broadcast %cst_8 : f32 to vector<2x32xf32>
    %10 = vector.extract_strided_slice %6 {offsets = [0, 0], sizes = [2, 128], strides = [1, 1]} : vector<16x128xf32> to vector<2x128xf32>
    %11 = arith.truncf %8 : vector<2x32xf32> to vector<2x32xbf16>
    %cst_9 = arith.constant dense<0.000000e+00> : vector<2x128xf32>
    %12 = tpu.matmul %11, %7, %cst_9 {dimension_numbers = #tpu.dot_dimension_numbers<[1], [0], [0], [1], [0, 0, 1, 1], [], []>} : vector<2x32xbf16>, vector<32x128xbf16>, vector<2x128xf32> -> vector<2x128xf32>
    %13 = arith.addf %10, %12 : vector<2x128xf32>
    %14 = vector.extract_strided_slice %13 {offsets = [0, 0], sizes = [2, 96], strides = [1, 1]} : vector<2x128xf32> to vector<2x96xf32>
    %15 = arith.negf %14 : vector<2x96xf32>
    %16 = math.exp %15 : vector<2x96xf32>
    %cst_10 = arith.constant 1.000000e+00 : f32
    %17 = vector.broadcast %cst_10 : f32 to vector<2x96xf32>
    %18 = arith.addf %17, %16 : vector<2x96xf32>
    %19 = arith.divf %17, %18 : vector<2x96xf32>
    %20 = vector.extract_strided_slice %13 {offsets = [0, 96], sizes = [2, 32], strides = [1, 1]} : vector<2x128xf32> to vector<2x32xf32>
    %21 = math.tanh %20 : vector<2x32xf32>
    %22 = vector.extract_strided_slice %19 {offsets = [0, 0], sizes = [2, 32], strides = [1, 1]} : vector<2x96xf32> to vector<2x32xf32>
    %23 = vector.extract_strided_slice %19 {offsets = [0, 32], sizes = [2, 32], strides = [1, 1]} : vector<2x96xf32> to vector<2x32xf32>
    %24 = vector.extract_strided_slice %19 {offsets = [0, 64], sizes = [2, 32], strides = [1, 1]} : vector<2x96xf32> to vector<2x32xf32>
    %25 = arith.mulf %23, %9 : vector<2x32xf32>
    %26 = arith.mulf %22, %21 : vector<2x32xf32>
    %27 = arith.addf %25, %26 : vector<2x32xf32>
    %28 = math.tanh %27 : vector<2x32xf32>
    %29 = arith.mulf %24, %28 : vector<2x32xf32>
    %30 = vector.extract_strided_slice %6 {offsets = [2, 0], sizes = [2, 128], strides = [1, 1]} : vector<16x128xf32> to vector<2x128xf32>
    %31 = arith.truncf %29 : vector<2x32xf32> to vector<2x32xbf16>
    %cst_11 = arith.constant dense<0.000000e+00> : vector<2x128xf32>
    %32 = tpu.matmul %31, %7, %cst_11 {dimension_numbers = #tpu.dot_dimension_numbers<[1], [0], [0], [1], [0, 0, 1, 1], [], []>} : vector<2x32xbf16>, vector<32x128xbf16>, vector<2x128xf32> -> vector<2x128xf32>
    %33 = arith.addf %30, %32 : vector<2x128xf32>
    %34 = vector.extract_strided_slice %33 {offsets = [0, 0], sizes = [2, 96], strides = [1, 1]} : vector<2x128xf32> to vector<2x96xf32>
    %35 = arith.negf %34 : vector<2x96xf32>
    %36 = math.exp %35 : vector<2x96xf32>
    %cst_12 = arith.constant 1.000000e+00 : f32
    %37 = vector.broadcast %cst_12 : f32 to vector<2x96xf32>
    %38 = arith.addf %37, %36 : vector<2x96xf32>
    %39 = arith.divf %37, %38 : vector<2x96xf32>
    %40 = vector.extract_strided_slice %33 {offsets = [0, 96], sizes = [2, 32], strides = [1, 1]} : vector<2x128xf32> to vector<2x32xf32>
    %41 = math.tanh %40 : vector<2x32xf32>
    %42 = vector.extract_strided_slice %39 {offsets = [0, 0], sizes = [2, 32], strides = [1, 1]} : vector<2x96xf32> to vector<2x32xf32>
    %43 = vector.extract_strided_slice %39 {offsets = [0, 32], sizes = [2, 32], strides = [1, 1]} : vector<2x96xf32> to vector<2x32xf32>
    %44 = vector.extract_strided_slice %39 {offsets = [0, 64], sizes = [2, 32], strides = [1, 1]} : vector<2x96xf32> to vector<2x32xf32>
    %45 = arith.mulf %43, %27 : vector<2x32xf32>
    %46 = arith.mulf %42, %41 : vector<2x32xf32>
    %47 = arith.addf %45, %46 : vector<2x32xf32>
    %48 = math.tanh %47 : vector<2x32xf32>
    %49 = arith.mulf %44, %48 : vector<2x32xf32>
    %50 = vector.extract_strided_slice %6 {offsets = [4, 0], sizes = [2, 128], strides = [1, 1]} : vector<16x128xf32> to vector<2x128xf32>
    %51 = arith.truncf %49 : vector<2x32xf32> to vector<2x32xbf16>
    %cst_13 = arith.constant dense<0.000000e+00> : vector<2x128xf32>
    %52 = tpu.matmul %51, %7, %cst_13 {dimension_numbers = #tpu.dot_dimension_numbers<[1], [0], [0], [1], [0, 0, 1, 1], [], []>} : vector<2x32xbf16>, vector<32x128xbf16>, vector<2x128xf32> -> vector<2x128xf32>
    %53 = arith.addf %50, %52 : vector<2x128xf32>
    %54 = vector.extract_strided_slice %53 {offsets = [0, 0], sizes = [2, 96], strides = [1, 1]} : vector<2x128xf32> to vector<2x96xf32>
    %55 = arith.negf %54 : vector<2x96xf32>
    %56 = math.exp %55 : vector<2x96xf32>
    %cst_14 = arith.constant 1.000000e+00 : f32
    %57 = vector.broadcast %cst_14 : f32 to vector<2x96xf32>
    %58 = arith.addf %57, %56 : vector<2x96xf32>
    %59 = arith.divf %57, %58 : vector<2x96xf32>
    %60 = vector.extract_strided_slice %53 {offsets = [0, 96], sizes = [2, 32], strides = [1, 1]} : vector<2x128xf32> to vector<2x32xf32>
    %61 = math.tanh %60 : vector<2x32xf32>
    %62 = vector.extract_strided_slice %59 {offsets = [0, 0], sizes = [2, 32], strides = [1, 1]} : vector<2x96xf32> to vector<2x32xf32>
    %63 = vector.extract_strided_slice %59 {offsets = [0, 32], sizes = [2, 32], strides = [1, 1]} : vector<2x96xf32> to vector<2x32xf32>
    %64 = vector.extract_strided_slice %59 {offsets = [0, 64], sizes = [2, 32], strides = [1, 1]} : vector<2x96xf32> to vector<2x32xf32>
    %65 = arith.mulf %63, %47 : vector<2x32xf32>
    %66 = arith.mulf %62, %61 : vector<2x32xf32>
    %67 = arith.addf %65, %66 : vector<2x32xf32>
    %68 = math.tanh %67 : vector<2x32xf32>
    %69 = arith.mulf %64, %68 : vector<2x32xf32>
    %70 = vector.extract_strided_slice %6 {offsets = [6, 0], sizes = [2, 128], strides = [1, 1]} : vector<16x128xf32> to vector<2x128xf32>
    %71 = arith.truncf %69 : vector<2x32xf32> to vector<2x32xbf16>
    %cst_15 = arith.constant dense<0.000000e+00> : vector<2x128xf32>
    %72 = tpu.matmul %71, %7, %cst_15 {dimension_numbers = #tpu.dot_dimension_numbers<[1], [0], [0], [1], [0, 0, 1, 1], [], []>} : vector<2x32xbf16>, vector<32x128xbf16>, vector<2x128xf32> -> vector<2x128xf32>
    %73 = arith.addf %70, %72 : vector<2x128xf32>
    %74 = vector.extract_strided_slice %73 {offsets = [0, 0], sizes = [2, 96], strides = [1, 1]} : vector<2x128xf32> to vector<2x96xf32>
    %75 = arith.negf %74 : vector<2x96xf32>
    %76 = math.exp %75 : vector<2x96xf32>
    %cst_16 = arith.constant 1.000000e+00 : f32
    %77 = vector.broadcast %cst_16 : f32 to vector<2x96xf32>
    %78 = arith.addf %77, %76 : vector<2x96xf32>
    %79 = arith.divf %77, %78 : vector<2x96xf32>
    %80 = vector.extract_strided_slice %73 {offsets = [0, 96], sizes = [2, 32], strides = [1, 1]} : vector<2x128xf32> to vector<2x32xf32>
    %81 = math.tanh %80 : vector<2x32xf32>
    %82 = vector.extract_strided_slice %79 {offsets = [0, 0], sizes = [2, 32], strides = [1, 1]} : vector<2x96xf32> to vector<2x32xf32>
    %83 = vector.extract_strided_slice %79 {offsets = [0, 32], sizes = [2, 32], strides = [1, 1]} : vector<2x96xf32> to vector<2x32xf32>
    %84 = vector.extract_strided_slice %79 {offsets = [0, 64], sizes = [2, 32], strides = [1, 1]} : vector<2x96xf32> to vector<2x32xf32>
    %85 = arith.mulf %83, %67 : vector<2x32xf32>
    %86 = arith.mulf %82, %81 : vector<2x32xf32>
    %87 = arith.addf %85, %86 : vector<2x32xf32>
    %88 = math.tanh %87 : vector<2x32xf32>
    %89 = arith.mulf %84, %88 : vector<2x32xf32>
    %90 = vector.extract_strided_slice %6 {offsets = [8, 0], sizes = [2, 128], strides = [1, 1]} : vector<16x128xf32> to vector<2x128xf32>
    %91 = arith.truncf %89 : vector<2x32xf32> to vector<2x32xbf16>
    %cst_17 = arith.constant dense<0.000000e+00> : vector<2x128xf32>
    %92 = tpu.matmul %91, %7, %cst_17 {dimension_numbers = #tpu.dot_dimension_numbers<[1], [0], [0], [1], [0, 0, 1, 1], [], []>} : vector<2x32xbf16>, vector<32x128xbf16>, vector<2x128xf32> -> vector<2x128xf32>
    %93 = arith.addf %90, %92 : vector<2x128xf32>
    %94 = vector.extract_strided_slice %93 {offsets = [0, 0], sizes = [2, 96], strides = [1, 1]} : vector<2x128xf32> to vector<2x96xf32>
    %95 = arith.negf %94 : vector<2x96xf32>
    %96 = math.exp %95 : vector<2x96xf32>
    %cst_18 = arith.constant 1.000000e+00 : f32
    %97 = vector.broadcast %cst_18 : f32 to vector<2x96xf32>
    %98 = arith.addf %97, %96 : vector<2x96xf32>
    %99 = arith.divf %97, %98 : vector<2x96xf32>
    %100 = vector.extract_strided_slice %93 {offsets = [0, 96], sizes = [2, 32], strides = [1, 1]} : vector<2x128xf32> to vector<2x32xf32>
    %101 = math.tanh %100 : vector<2x32xf32>
    %102 = vector.extract_strided_slice %99 {offsets = [0, 0], sizes = [2, 32], strides = [1, 1]} : vector<2x96xf32> to vector<2x32xf32>
    %103 = vector.extract_strided_slice %99 {offsets = [0, 32], sizes = [2, 32], strides = [1, 1]} : vector<2x96xf32> to vector<2x32xf32>
    %104 = vector.extract_strided_slice %99 {offsets = [0, 64], sizes = [2, 32], strides = [1, 1]} : vector<2x96xf32> to vector<2x32xf32>
    %105 = arith.mulf %103, %87 : vector<2x32xf32>
    %106 = arith.mulf %102, %101 : vector<2x32xf32>
    %107 = arith.addf %105, %106 : vector<2x32xf32>
    %108 = math.tanh %107 : vector<2x32xf32>
    %109 = arith.mulf %104, %108 : vector<2x32xf32>
    %110 = vector.extract_strided_slice %6 {offsets = [10, 0], sizes = [2, 128], strides = [1, 1]} : vector<16x128xf32> to vector<2x128xf32>
    %111 = arith.truncf %109 : vector<2x32xf32> to vector<2x32xbf16>
    %cst_19 = arith.constant dense<0.000000e+00> : vector<2x128xf32>
    %112 = tpu.matmul %111, %7, %cst_19 {dimension_numbers = #tpu.dot_dimension_numbers<[1], [0], [0], [1], [0, 0, 1, 1], [], []>} : vector<2x32xbf16>, vector<32x128xbf16>, vector<2x128xf32> -> vector<2x128xf32>
    %113 = arith.addf %110, %112 : vector<2x128xf32>
    %114 = vector.extract_strided_slice %113 {offsets = [0, 0], sizes = [2, 96], strides = [1, 1]} : vector<2x128xf32> to vector<2x96xf32>
    %115 = arith.negf %114 : vector<2x96xf32>
    %116 = math.exp %115 : vector<2x96xf32>
    %cst_20 = arith.constant 1.000000e+00 : f32
    %117 = vector.broadcast %cst_20 : f32 to vector<2x96xf32>
    %118 = arith.addf %117, %116 : vector<2x96xf32>
    %119 = arith.divf %117, %118 : vector<2x96xf32>
    %120 = vector.extract_strided_slice %113 {offsets = [0, 96], sizes = [2, 32], strides = [1, 1]} : vector<2x128xf32> to vector<2x32xf32>
    %121 = math.tanh %120 : vector<2x32xf32>
    %122 = vector.extract_strided_slice %119 {offsets = [0, 0], sizes = [2, 32], strides = [1, 1]} : vector<2x96xf32> to vector<2x32xf32>
    %123 = vector.extract_strided_slice %119 {offsets = [0, 32], sizes = [2, 32], strides = [1, 1]} : vector<2x96xf32> to vector<2x32xf32>
    %124 = vector.extract_strided_slice %119 {offsets = [0, 64], sizes = [2, 32], strides = [1, 1]} : vector<2x96xf32> to vector<2x32xf32>
    %125 = arith.mulf %123, %107 : vector<2x32xf32>
    %126 = arith.mulf %122, %121 : vector<2x32xf32>
    %127 = arith.addf %125, %126 : vector<2x32xf32>
    %128 = math.tanh %127 : vector<2x32xf32>
    %129 = arith.mulf %124, %128 : vector<2x32xf32>
    %130 = vector.extract_strided_slice %6 {offsets = [12, 0], sizes = [2, 128], strides = [1, 1]} : vector<16x128xf32> to vector<2x128xf32>
    %131 = arith.truncf %129 : vector<2x32xf32> to vector<2x32xbf16>
    %cst_21 = arith.constant dense<0.000000e+00> : vector<2x128xf32>
    %132 = tpu.matmul %131, %7, %cst_21 {dimension_numbers = #tpu.dot_dimension_numbers<[1], [0], [0], [1], [0, 0, 1, 1], [], []>} : vector<2x32xbf16>, vector<32x128xbf16>, vector<2x128xf32> -> vector<2x128xf32>
    %133 = arith.addf %130, %132 : vector<2x128xf32>
    %134 = vector.extract_strided_slice %133 {offsets = [0, 0], sizes = [2, 96], strides = [1, 1]} : vector<2x128xf32> to vector<2x96xf32>
    %135 = arith.negf %134 : vector<2x96xf32>
    %136 = math.exp %135 : vector<2x96xf32>
    %cst_22 = arith.constant 1.000000e+00 : f32
    %137 = vector.broadcast %cst_22 : f32 to vector<2x96xf32>
    %138 = arith.addf %137, %136 : vector<2x96xf32>
    %139 = arith.divf %137, %138 : vector<2x96xf32>
    %140 = vector.extract_strided_slice %133 {offsets = [0, 96], sizes = [2, 32], strides = [1, 1]} : vector<2x128xf32> to vector<2x32xf32>
    %141 = math.tanh %140 : vector<2x32xf32>
    %142 = vector.extract_strided_slice %139 {offsets = [0, 0], sizes = [2, 32], strides = [1, 1]} : vector<2x96xf32> to vector<2x32xf32>
    %143 = vector.extract_strided_slice %139 {offsets = [0, 32], sizes = [2, 32], strides = [1, 1]} : vector<2x96xf32> to vector<2x32xf32>
    %144 = vector.extract_strided_slice %139 {offsets = [0, 64], sizes = [2, 32], strides = [1, 1]} : vector<2x96xf32> to vector<2x32xf32>
    %145 = arith.mulf %143, %127 : vector<2x32xf32>
    %146 = arith.mulf %142, %141 : vector<2x32xf32>
    %147 = arith.addf %145, %146 : vector<2x32xf32>
    %148 = math.tanh %147 : vector<2x32xf32>
    %149 = arith.mulf %144, %148 : vector<2x32xf32>
    %150 = vector.extract_strided_slice %6 {offsets = [14, 0], sizes = [2, 128], strides = [1, 1]} : vector<16x128xf32> to vector<2x128xf32>
    %151 = arith.truncf %149 : vector<2x32xf32> to vector<2x32xbf16>
    %cst_23 = arith.constant dense<0.000000e+00> : vector<2x128xf32>
    %152 = tpu.matmul %151, %7, %cst_23 {dimension_numbers = #tpu.dot_dimension_numbers<[1], [0], [0], [1], [0, 0, 1, 1], [], []>} : vector<2x32xbf16>, vector<32x128xbf16>, vector<2x128xf32> -> vector<2x128xf32>
    %153 = arith.addf %150, %152 : vector<2x128xf32>
    %154 = vector.extract_strided_slice %153 {offsets = [0, 0], sizes = [2, 96], strides = [1, 1]} : vector<2x128xf32> to vector<2x96xf32>
    %155 = arith.negf %154 : vector<2x96xf32>
    %156 = math.exp %155 : vector<2x96xf32>
    %cst_24 = arith.constant 1.000000e+00 : f32
    %157 = vector.broadcast %cst_24 : f32 to vector<2x96xf32>
    %158 = arith.addf %157, %156 : vector<2x96xf32>
    %159 = arith.divf %157, %158 : vector<2x96xf32>
    %160 = vector.extract_strided_slice %153 {offsets = [0, 96], sizes = [2, 32], strides = [1, 1]} : vector<2x128xf32> to vector<2x32xf32>
    %161 = math.tanh %160 : vector<2x32xf32>
    %162 = vector.extract_strided_slice %159 {offsets = [0, 0], sizes = [2, 32], strides = [1, 1]} : vector<2x96xf32> to vector<2x32xf32>
    %163 = vector.extract_strided_slice %159 {offsets = [0, 32], sizes = [2, 32], strides = [1, 1]} : vector<2x96xf32> to vector<2x32xf32>
    %164 = vector.extract_strided_slice %159 {offsets = [0, 64], sizes = [2, 32], strides = [1, 1]} : vector<2x96xf32> to vector<2x32xf32>
    %165 = arith.mulf %163, %147 : vector<2x32xf32>
    %166 = arith.mulf %162, %161 : vector<2x32xf32>
    %167 = arith.addf %165, %166 : vector<2x32xf32>
    %168 = math.tanh %167 : vector<2x32xf32>
    %169 = arith.mulf %164, %168 : vector<2x32xf32>
    %170 = arith.truncf %169 : vector<2x32xf32> to vector<2x32xbf16>
    %c0_25 = arith.constant 0 : index
    %c0_26 = arith.constant 0 : index
    %171 = vector.load %arg4[%c0_25, %c0_26] : memref<32x256xbf16, #tpu.memory_space<vmem>>, vector<32x256xbf16>
    %cst_27 = arith.constant dense<0.000000e+00> : vector<2x256xf32>
    %172 = tpu.matmul %170, %171, %cst_27 {dimension_numbers = #tpu.dot_dimension_numbers<[1], [0], [0], [1], [0, 0, 1, 1], [], []>} : vector<2x32xbf16>, vector<32x256xbf16>, vector<2x256xf32> -> vector<2x256xf32>
    %c0_28 = arith.constant 0 : index
    %c0_29 = arith.constant 0 : index
    %173 = vector.load %arg5[%c0_28, %c0_29] : memref<1x256xf32, #tpu.memory_space<vmem>>, vector<1x256xf32>
    %174 = vector.broadcast %173 : vector<1x256xf32> to vector<2x256xf32>
    %175 = arith.addf %172, %174 : vector<2x256xf32>
    %cst_30 = arith.constant 0.000000e+00 : f32
    %176 = vector.broadcast %cst_30 : f32 to vector<2x256xf32>
    %177 = arith.maximumf %175, %176 : vector<2x256xf32>
    %178 = arith.truncf %177 : vector<2x256xf32> to vector<2x256xbf16>
    %c0_31 = arith.constant 0 : index
    %c0_32 = arith.constant 0 : index
    %179 = vector.load %arg6[%c0_31, %c0_32] : memref<256x256xbf16, #tpu.memory_space<vmem>>, vector<256x256xbf16>
    %cst_33 = arith.constant dense<0.000000e+00> : vector<2x256xf32>
    %180 = tpu.matmul %178, %179, %cst_33 {dimension_numbers = #tpu.dot_dimension_numbers<[1], [0], [0], [1], [0, 0, 1, 1], [], []>} : vector<2x256xbf16>, vector<256x256xbf16>, vector<2x256xf32> -> vector<2x256xf32>
    %c0_34 = arith.constant 0 : index
    %c0_35 = arith.constant 0 : index
    %181 = vector.load %arg7[%c0_34, %c0_35] : memref<1x256xf32, #tpu.memory_space<vmem>>, vector<1x256xf32>
    %182 = vector.broadcast %181 : vector<1x256xf32> to vector<2x256xf32>
    %183 = arith.addf %180, %182 : vector<2x256xf32>
    %cst_36 = arith.constant 0.000000e+00 : f32
    %184 = vector.broadcast %cst_36 : f32 to vector<2x256xf32>
    %185 = arith.maximumf %183, %184 : vector<2x256xf32>
    %186 = arith.truncf %185 : vector<2x256xf32> to vector<2x256xbf16>
    %c0_37 = arith.constant 0 : index
    %c0_38 = arith.constant 0 : index
    %187 = vector.load %arg8[%c0_37, %c0_38] : memref<256x128xbf16, #tpu.memory_space<vmem>>, vector<256x128xbf16>
    %cst_39 = arith.constant dense<0.000000e+00> : vector<2x128xf32>
    %188 = tpu.matmul %186, %187, %cst_39 {dimension_numbers = #tpu.dot_dimension_numbers<[1], [0], [0], [1], [0, 0, 1, 1], [], []>} : vector<2x256xbf16>, vector<256x128xbf16>, vector<2x128xf32> -> vector<2x128xf32>
    %c0_40 = arith.constant 0 : index
    %c0_41 = arith.constant 0 : index
    %189 = vector.load %arg9[%c0_40, %c0_41] : memref<1x128xf32, #tpu.memory_space<vmem>>, vector<1x128xf32>
    %190 = vector.broadcast %189 : vector<1x128xf32> to vector<2x128xf32>
    %191 = arith.addf %188, %190 : vector<2x128xf32>
    %c0_42 = arith.constant 0 : index
    %c0_43 = arith.constant 0 : index
    %192 = vector.load %arg10[%c0_42, %c0_43] : memref<2x128xf32, #tpu.memory_space<vmem>>, vector<2x128xf32>
    tpu.vector_store %arg10[%c0_42, %c0_43], %191 {strides = array<i32>} : memref<2x128xf32, #tpu.memory_space<vmem>>, vector<2x128xf32>,
    return
  }
}

</mosaic_0001>

<llo_original>
// kernel: lstm_model_forward.1
$region0: #{lstm_model_forward.1}
  #allocation0 [shape = 'u32[]', space=smem, size = 0x4, offset = 0x4, fixed_abs, tag = 'smem constant byte address 0x4 - core index']
  #allocation1 [shape = 'u32[72,128]{1,0:T(1,128)}', space=vmem, size = 0x9000, scoped, tag = 'internal scratch']
  %s0 = inlined_call_operand.vmem [shape: f32[16,16], index: 0, kind: input, shape index: {}]
  %s1 = inlined_call_operand.vmem [shape: bf16[16,128], index: 1, kind: input, shape index: {}]
  %s2 = inlined_call_operand.hbm [shape: bf16[32,128], index: 2, kind: input, shape index: {}]
  %s3 = inlined_call_operand.hbm [shape: f32[1,128], index: 3, kind: input, shape index: {}]
  %s4 = inlined_call_operand.vmem [shape: bf16[32,256], index: 4, kind: input, shape index: {}]
  %s5 = inlined_call_operand.hbm [shape: f32[1,256], index: 5, kind: input, shape index: {}]
  %s6 = inlined_call_operand.hbm [shape: bf16[256,256], index: 6, kind: input, shape index: {}]
  %s7 = inlined_call_operand.hbm [shape: f32[1,256], index: 7, kind: input, shape index: {}]
  %s8 = inlined_call_operand.hbm [shape: bf16[256,128], index: 8, kind: input, shape index: {}]
  %s9 = inlined_call_operand.hbm [shape: f32[1,128], index: 9, kind: input, shape index: {}]
  %s10 = inlined_call_operand.hbm [shape: f32[2,128], index: 10, kind: output, shape index: {}]
  %s11 = sld [smem:[#allocation0]]
  $region78: #{lstm_model_forward.1} parent=0
    _
  %s13 = ssub.s32 1, %s11
  %s14 = scalar_select 0, %s13, %s11
  $region1: #{lstm_model_forward.1} parent=0
    #allocation2 [shape = 'u8[8192]{0}', space=vmem, size = 0x2000, scoped, tag = 'input window, operand 2, single buffered']
    #allocation3 [shape = 's32[1]{0}', space=sflag, size = 0x4, scoped, tag = 'scoped memory for lstm_model_forward.1']
    #allocation4 [shape = 's32[1]{0}', space=sflag, size = 0x4, scoped, tag = 'scoped memory for lstm_model_forward.1']
    #allocation5 [shape = 'u8[512]{0}', space=vmem, size = 0x400, scoped, tag = 'input window, operand 3, single buffered']
    #allocation6 [shape = 's32[1]{0}', space=sflag, size = 0x4, scoped, tag = 'scoped memory for lstm_model_forward.1']
    #allocation7 [shape = 'u8[1024]{0}', space=vmem, size = 0x400, scoped, tag = 'input window, operand 5, single buffered']
    #allocation8 [shape = 'u8[131072]{0}', space=vmem, size = 0x20000, scoped, tag = 'input window, operand 6, single buffered']
    #allocation9 [shape = 's32[1]{0}', space=sflag, size = 0x4, scoped, tag = 'scoped memory for lstm_model_forward.1']
    #allocation10 [shape = 'u8[1024]{0}', space=vmem, size = 0x400, scoped, tag = 'input window, operand 7, single buffered']
    #allocation11 [shape = 'u8[65536]{0}', space=vmem, size = 0x10000, scoped, tag = 'input window, operand 8, single buffered']
    #allocation12 [shape = 's32[1]{0}', space=sflag, size = 0x4, scoped, tag = 'scoped memory for lstm_model_forward.1']
    #allocation13 [shape = 'u8[512]{0}', space=vmem, size = 0x400, scoped, tag = 'input window, operand 9, single buffered']
    #allocation14 [shape = 'u8[1024]{0}', space=vmem, size = 0x400, scoped, tag = 'output window, operand 0, single buffered']
    %15 = vsyncpa [#allocation3], 0
    %16 = vsyncpa [#allocation6], 0
    %17 = vsyncpa [#allocation9], 0
    %18 = vsyncpa [#allocation12], 0
    %19 = vsyncpa [#allocation4], 0
    // Predicated region
    $region2: #{lstm_model_forward.1} parent=1 // pred_check
      _
    $region3: #{lstm_model_forward.1} parent=1 // pred_check_branch
      %21 = sbr.rel (0) target = $region5
    $region4: #{lstm_model_forward.1} parent=1 // pred_region
      _
    $region5: #{lstm_model_forward.1} parent=1 // pred_fallthru
      _
    // Predicated region
    $region6: #{lstm_model_forward.1} parent=1 // pred_check
      _
    $region7: #{lstm_model_forward.1} parent=1 // pred_check_branch
      %23 = sbr.rel (0) target = $region9
    $region8: #{lstm_model_forward.1} parent=1 // pred_region
      _
    $region9: #{lstm_model_forward.1} parent=1 // pred_fallthru
      _
    // Predicated region
    $region10: #{lstm_model_forward.1} parent=1 // pred_check
      _
    $region11: #{lstm_model_forward.1} parent=1 // pred_check_branch
      %25 = sbr.rel (0) target = $region13
    $region12: #{lstm_model_forward.1} parent=1 // pred_region
      %27 = vsyncadd [#allocation3], 0
      %s28 = sshll.u32 %s2, 4
      %s29 = int_to_ptr.hbm [resolvable:$true] %s28
      %s30 = sshll.u32 [#allocation2], 4
      %s31 = int_to_ptr.vmem [resolvable:$true] %s30
      %36 = dma.hbm_to_vmem [thread:$0]  %s29, 256, %s31, [#allocation3], 64, 64, 4
    $region13: #{lstm_model_forward.1} parent=1 // pred_fallthru
      _
    // Predicated region
    $region14: #{lstm_model_forward.1} parent=1 // pred_check
      _
    $region15: #{lstm_model_forward.1} parent=1 // pred_check_branch
      %38 = sbr.rel (0) target = $region17
    $region16: #{lstm_model_forward.1} parent=1 // pred_region
      %40 = vsyncadd [#allocation6], 0
      %s42 = sshll.u32 %s3, 4
      %s43 = int_to_ptr.hbm [resolvable:$true] %s42
      %s44 = sshll.u32 [#allocation5], 4
      %s45 = int_to_ptr.vmem [resolvable:$true] %s44
      %47 = dma.hbm_to_vmem [thread:$0]  %s43, 16, %s45, [#allocation6]
    $region17: #{lstm_model_forward.1} parent=1 // pred_fallthru
      _
    // Predicated region
    $region18: #{lstm_model_forward.1} parent=1 // pred_check
      _
    $region19: #{lstm_model_forward.1} parent=1 // pred_check_branch
      %49 = sbr.rel (0) target = $region21
    $region20: #{lstm_model_forward.1} parent=1 // pred_region
      _
    $region21: #{lstm_model_forward.1} parent=1 // pred_fallthru
      _
    // Predicated region
    $region22: #{lstm_model_forward.1} parent=1 // pred_check
      _
    $region23: #{lstm_model_forward.1} parent=1 // pred_check_branch
      %51 = sbr.rel (0) target = $region25
    $region24: #{lstm_model_forward.1} parent=1 // pred_region
      %53 = vsyncadd [#allocation6], 0
      %s55 = sshll.u32 %s5, 4
      %s56 = int_to_ptr.hbm [resolvable:$true] %s55
      %s57 = sshll.u32 [#allocation7], 4
      %s58 = int_to_ptr.vmem [resolvable:$true] %s57
      %60 = dma.hbm_to_vmem [thread:$0]  %s56, 32, %s58, [#allocation6]
    $region25: #{lstm_model_forward.1} parent=1 // pred_fallthru
      _
    // Predicated region
    $region26: #{lstm_model_forward.1} parent=1 // pred_check
      _
    $region27: #{lstm_model_forward.1} parent=1 // pred_check_branch
      %62 = sbr.rel (0) target = $region29
    $region28: #{lstm_model_forward.1} parent=1 // pred_region
      %64 = vsyncadd [#allocation9], 0
      %s65 = sshll.u32 %s6, 4
      %s66 = int_to_ptr.hbm [resolvable:$true] %s65
      %s67 = sshll.u32 [#allocation8], 4
      %s68 = int_to_ptr.vmem [resolvable:$true] %s67
      %73 = dma.hbm_to_vmem [thread:$0]  %s66, 4096, %s68, [#allocation9], 128, 128, 8
    $region29: #{lstm_model_forward.1} parent=1 // pred_fallthru
      _
    // Predicated region
    $region30: #{lstm_model_forward.1} parent=1 // pred_check
      _
    $region31: #{lstm_model_forward.1} parent=1 // pred_check_branch
      %75 = sbr.rel (0) target = $region33
    $region32: #{lstm_model_forward.1} parent=1 // pred_region
      %77 = vsyncadd [#allocation9], 0
      %s79 = sshll.u32 %s7, 4
      %s80 = int_to_ptr.hbm [resolvable:$true] %s79
      %s81 = sshll.u32 [#allocation10], 4
      %s82 = int_to_ptr.vmem [resolvable:$true] %s81
      %84 = dma.hbm_to_vmem [thread:$0]  %s80, 32, %s82, [#allocation9]
    $region33: #{lstm_model_forward.1} parent=1 // pred_fallthru
      _
    // Predicated region
    $region34: #{lstm_model_forward.1} parent=1 // pred_check
      _
    $region35: #{lstm_model_forward.1} parent=1 // pred_check_branch
      %86 = sbr.rel (0) target = $region37
    $region36: #{lstm_model_forward.1} parent=1 // pred_region
      %88 = vsyncadd [#allocation12], 0
      %s89 = sshll.u32 %s8, 4
      %s90 = int_to_ptr.hbm [resolvable:$true] %s89
      %s91 = sshll.u32 [#allocation11], 4
      %s92 = int_to_ptr.vmem [resolvable:$true] %s91
      %97 = dma.hbm_to_vmem [thread:$0]  %s90, 2048, %s92, [#allocation12], 64, 64, 4
    $region37: #{lstm_model_forward.1} parent=1 // pred_fallthru
      _
    // Predicated region
    $region38: #{lstm_model_forward.1} parent=1 // pred_check
      _
    $region39: #{lstm_model_forward.1} parent=1 // pred_check_branch
      %99 = sbr.rel (0) target = $region41
    $region40: #{lstm_model_forward.1} parent=1 // pred_region
      %101 = vsyncadd [#allocation12], 0
      %s103 = sshll.u32 %s9, 4
      %s104 = int_to_ptr.hbm [resolvable:$true] %s103
      %s105 = sshll.u32 [#allocation13], 4
      %s106 = int_to_ptr.vmem [resolvable:$true] %s105
      %108 = dma.hbm_to_vmem [thread:$0]  %s104, 16, %s106, [#allocation12]
    $region41: #{lstm_model_forward.1} parent=1 // pred_fallthru
      _
    // Predicated region
    $region42: #{lstm_model_forward.1} parent=1 // pred_check
      _
    $region43: #{lstm_model_forward.1} parent=1 // pred_check_branch
      %110 = sbr.rel (0) target = $region45
    $region44: #{lstm_model_forward.1} parent=1 // pred_region
      %112 = dma.done [#allocation3], 256
    $region45: #{lstm_model_forward.1} parent=1 // pred_fallthru
      _
    // Predicated region
    $region46: #{lstm_model_forward.1} parent=1 // pred_check
      _
    $region47: #{lstm_model_forward.1} parent=1 // pred_check_branch
      %114 = sbr.rel (0) target = $region49
    $region48: #{lstm_model_forward.1} parent=1 // pred_region
      %116 = dma.done [#allocation6], 16
    $region49: #{lstm_model_forward.1} parent=1 // pred_fallthru
      _
    // Predicated region
    $region50: #{lstm_model_forward.1} parent=1 // pred_check
      _
    $region51: #{lstm_model_forward.1} parent=1 // pred_check_branch
      %118 = sbr.rel (0) target = $region53
    $region52: #{lstm_model_forward.1} parent=1 // pred_region
      %120 = dma.done [#allocation6], 32
    $region53: #{lstm_model_forward.1} parent=1 // pred_fallthru
      _
    // Predicated region
    $region54: #{lstm_model_forward.1} parent=1 // pred_check
      _
    $region55: #{lstm_model_forward.1} parent=1 // pred_check_branch
      %122 = sbr.rel (0) target = $region57
    $region56: #{lstm_model_forward.1} parent=1 // pred_region
      %124 = dma.done [#allocation9], 4096
    $region57: #{lstm_model_forward.1} parent=1 // pred_fallthru
      _
    // Predicated region
    $region58: #{lstm_model_forward.1} parent=1 // pred_check
      _
    $region59: #{lstm_model_forward.1} parent=1 // pred_check_branch
      %126 = sbr.rel (0) target = $region61
    $region60: #{lstm_model_forward.1} parent=1 // pred_region
      %128 = dma.done [#allocation9], 32
    $region61: #{lstm_model_forward.1} parent=1 // pred_fallthru
      _
    // Predicated region
    $region62: #{lstm_model_forward.1} parent=1 // pred_check
      _
    $region63: #{lstm_model_forward.1} parent=1 // pred_check_branch
      %130 = sbr.rel (0) target = $region65
    $region64: #{lstm_model_forward.1} parent=1 // pred_region
      %132 = dma.done [#allocation12], 2048
    $region65: #{lstm_model_forward.1} parent=1 // pred_fallthru
      _
    // Predicated region
    $region66: #{lstm_model_forward.1} parent=1 // pred_check
      _
    $region67: #{lstm_model_forward.1} parent=1 // pred_check_branch
      %134 = sbr.rel (0) target = $region69
    $region68: #{lstm_model_forward.1} parent=1 // pred_region
      %136 = dma.done [#allocation12], 16
    $region69: #{lstm_model_forward.1} parent=1 // pred_fallthru
      _
    %v138 = vld [vmem:[%s0] sm:$0xff]
    %v139 = vld [vmem:[%s0 + $0x8] sm:$0xff]
    %v140 = vpack.c.bf16 %v139, %v138
    %v141 = vld [vmem:[%s1] sm:$0xf]
    %v142 = vld [vmem:[%s1 + $0x4] sm:$0xf]
    %v143 = vld [vmem:[#allocation5] sm:$0x1]
    %v145 = vperm.slane %v143, 0
    %v149 = vunpack.c.l.b16 %v141
    %v150 = vunpack.c.l.b16 %v142
    %v151 = vpack.c.b16 %v150, %v149
    %vm153 = vcmask 130048
    %v155 = vsel %vm153, %v140, 0
    %157 = vmatpush.bf16.msra.mxu0 0
    %158 = vmatpush.bf16.msra.mxu0 0
    %159 = vmatpush.bf16.msra.mxu0 0
    %160 = vmatpush.bf16.msra.mxu0 0
    %161 = vmatpush.bf16.msra.mxu0 0
    %162 = vmatpush.bf16.msra.mxu0 0
    %163 = vmatpush.bf16.msra.mxu0 0
    %164 = vmatpush.bf16.msra.mxu0 %v151
    %165 = vmatmul.bf16.gmra.mxu0 %v155
    %v166 = vpop.f32.mrf.mxu0
    %v167 = vadd.f32 %v145, %v166
    %v168 = vpop.f32.mrf.mxu0
    %v169 = vadd.f32 %v145, %v168
    %170 = vdwg.mxu0
    %v171 = vld [vmem:[#allocation2] sm:$0xf]
    %v172 = vld [vmem:[#allocation2 + $0x4] sm:$0xf]
    %v173 = vld [vmem:[#allocation2 + $0x8] sm:$0xf]
    %v174 = vld [vmem:[#allocation2 + $0xc] sm:$0xf]
    %v179 = vunpack.c.l.b16 %v171
    %v180 = vunpack.c.l.b16 %v172
    %v181 = vunpack.c.l.b16 %v173
    %v182 = vunpack.c.l.b16 %v174
    %v183 = vpack.c.b16 %v180, %v179
    %v184 = vpack.c.b16 %v182, %v181
    %vm187 = vcmask 261120
    %v189 = vsel %vm187, 0, 0
    %191 = vmatpush.bf16.msra.mxu0 0
    %192 = vmatpush.bf16.msra.mxu0 0
    %193 = vmatpush.bf16.msra.mxu0 0
    %194 = vmatpush.bf16.msra.mxu0 0
    %195 = vmatpush.bf16.msra.mxu0 0
    %196 = vmatpush.bf16.msra.mxu0 0
    %197 = vmatpush.bf16.msra.mxu0 %v184
    %198 = vmatpush.bf16.msra.mxu0 %v183
    %199 = vmatmul.bf16.gmra.mxu0 %v189
    %v200 = vpop.f32.mrf.mxu0
    %v201 = vadd.f32 0.0, %v200
    %v202 = vpop.f32.mrf.mxu0
    %203 = vdwg.mxu0
    %v204 = vadd.f32 %v167, %v201
    %v205 = vxor.u32 %v204, 2147483648
    %v206 = vmul.f32 %v205, 1.442695
    %v207 = vpow.pop %v206
    %v208 = vadd.f32 %v207, 1.0
    %v209 = vrcp.pop %v208
    %v210 = vmul.f32 %v208, %v209
    %v211 = vsub.f32 1.0, %v210
    %v212 = vmul.f32 %v209, %v211
    %v213 = vadd.f32 %v209, %v212
    %vm214 = vweird.f32 %v208
    %vm215 = vweird.f32 %v209
    %vm216 = vmor %vm214, %vm215
    %v217 = vsel %vm216, %v209, %v213
    %v218 = vand.u32 2147483647, %v208
    %vm219 = vcmp.eq.f32.partialorder %v218, 8.507059e+37
    %v220 = vand.u32 %v208, 2147483648
    %v221 = vor.u32 1.1754944e-38, %v220
    %v222 = vsel %vm219, %v221, %v217
    %v223 = vmul.f32 1.0, %v222
    %v224 = vtanh.pop %v204
    %v225 = vmul.f32 %v223, 0.0
    %227 = vrot.lane.b32.xlu0 %v224, 32
    %v228 = vpop.permute.xlu0 %227
    %v230 = vmul.f32 %v223, %v228
    %232 = vrot.lane.b32.xlu0 %v230, 32
    %v233 = vpop.permute.xlu0 %232
    %v235 = vadd.f32 %v225, %v233
    %v236 = vtanh.pop %v235
    %238 = vrot.lane.b32.xlu0 %v236, 32
    %v239 = vpop.permute.xlu0 %238
    %v241 = vmul.f32 %v223, %v239
    %v242 = vpack.c.bf16 %v241, %v241
    %244 = vrot.lane.b32.xlu0 %v242, 64
    %v245 = vpop.permute.xlu0 %244
    %v247 = vsel %vm187, %v245, 0
    %249 = vmatpush.bf16.msra.mxu0 0
    %250 = vmatpush.bf16.msra.mxu0 0
    %251 = vmatpush.bf16.msra.mxu0 0
    %252 = vmatpush.bf16.msra.mxu0 0
    %253 = vmatpush.bf16.msra.mxu0 0
    %254 = vmatpush.bf16.msra.mxu0 0
    %255 = vmatpush.bf16.msra.mxu0 %v184
    %256 = vmatpush.bf16.msra.mxu0 %v183
    %257 = vmatmul.bf16.gmra.mxu0 %v247
    %v258 = vpop.f32.mrf.mxu0
    %v259 = vadd.f32 0.0, %v258
    %v260 = vpop.f32.mrf.mxu0
    %261 = vdwg.mxu0
    %v263 = vrot.slane %v259, 6
    %v265 = vadd.f32 %v167, %v263
    %v266 = vxor.u32 %v265, 2147483648
    %v267 = vmul.f32 %v266, 1.442695
    %v268 = vpow.pop %v267
    %v269 = vadd.f32 %v268, 1.0
    %v270 = vrcp.pop %v269
    %v271 = vmul.f32 %v269, %v270
    %v272 = vsub.f32 1.0, %v271
    %v273 = vmul.f32 %v270, %v272
    %v274 = vadd.f32 %v270, %v273
    %vm275 = vweird.f32 %v269
    %vm276 = vweird.f32 %v270
    %vm277 = vmor %vm275, %vm276
    %v278 = vsel %vm277, %v270, %v274
    %v279 = vand.u32 2147483647, %v269
    %vm280 = vcmp.eq.f32.partialorder %v279, 8.507059e+37
    %v281 = vand.u32 %v269, 2147483648
    %v282 = vor.u32 1.1754944e-38, %v281
    %v283 = vsel %vm280, %v282, %v278
    %v284 = vmul.f32 1.0, %v283
    %v285 = vtanh.pop %v265
    %v287 = vrot.slane %v235, 6
    %v289 = vmul.f32 %v284, %v287
    %291 = vrot.lane.b32.xlu0 %v285, 32
    %v292 = vpop.permute.xlu0 %291
    %v294 = vmul.f32 %v284, %v292
    %296 = vrot.lane.b32.xlu0 %v294, 32
    %v297 = vpop.permute.xlu0 %296
    %v299 = vadd.f32 %v289, %v297
    %v300 = vtanh.pop %v299
    %302 = vrot.lane.b32.xlu0 %v300, 32
    %v303 = vpop.permute.xlu0 %302
    %v305 = vmul.f32 %v284, %v303
    %v306 = vpack.c.bf16 %v305, %v305
    %v308 = vrot.slane %v306, 1
    %309 = vrot.lane.b32.xlu0 %v308, 64
    %v310 = vpop.permute.xlu0 %309
    %v312 = vsel %vm187, %v310, 0
    %314 = vmatpush.bf16.msra.mxu0 0
    %315 = vmatpush.bf16.msra.mxu0 0
    %316 = vmatpush.bf16.msra.mxu0 0
    %317 = vmatpush.bf16.msra.mxu0 0
    %318 = vmatpush.bf16.msra.mxu0 0
    %319 = vmatpush.bf16.msra.mxu0 0
    %320 = vmatpush.bf16.msra.mxu0 %v184
    %321 = vmatpush.bf16.msra.mxu0 %v183
    %322 = vmatmul.bf16.gmra.mxu0 %v312
    %v323 = vpop.f32.mrf.mxu0
    %v324 = vadd.f32 0.0, %v323
    %v325 = vpop.f32.mrf.mxu0
    %326 = vdwg.mxu0
    %v328 = vrot.slane %v324, 4
    %v330 = vadd.f32 %v167, %v328
    %v331 = vxor.u32 %v330, 2147483648
    %v332 = vmul.f32 %v331, 1.442695
    %v333 = vpow.pop %v332
    %v334 = vadd.f32 %v333, 1.0
    %v335 = vrcp.pop %v334
    %v336 = vmul.f32 %v334, %v335
    %v337 = vsub.f32 1.0, %v336
    %v338 = vmul.f32 %v335, %v337
    %v339 = vadd.f32 %v335, %v338
    %vm340 = vweird.f32 %v334
    %vm341 = vweird.f32 %v335
    %vm342 = vmor %vm340, %vm341
    %v343 = vsel %vm342, %v335, %v339
    %v344 = vand.u32 2147483647, %v334
    %vm345 = vcmp.eq.f32.partialorder %v344, 8.507059e+37
    %v346 = vand.u32 %v334, 2147483648
    %v347 = vor.u32 1.1754944e-38, %v346
    %v348 = vsel %vm345, %v347, %v343
    %v349 = vmul.f32 1.0, %v348
    %v350 = vtanh.pop %v330
    %v352 = vrot.slane %v299, 6
    %v354 = vmul.f32 %v349, %v352
    %356 = vrot.lane.b32.xlu0 %v350, 32
    %v357 = vpop.permute.xlu0 %356
    %v359 = vmul.f32 %v349, %v357
    %361 = vrot.lane.b32.xlu0 %v359, 32
    %v362 = vpop.permute.xlu0 %361
    %v364 = vadd.f32 %v354, %v362
    %v365 = vtanh.pop %v364
    %367 = vrot.lane.b32.xlu0 %v365, 32
    %v368 = vpop.permute.xlu0 %367
    %v370 = vmul.f32 %v349, %v368
    %v371 = vpack.c.bf16 %v370, %v370
    %v373 = vrot.slane %v371, 2
    %374 = vrot.lane.b32.xlu0 %v373, 64
    %v375 = vpop.permute.xlu0 %374
    %v377 = vsel %vm187, %v375, 0
    %379 = vmatpush.bf16.msra.mxu0 0
    %380 = vmatpush.bf16.msra.mxu0 0
    %381 = vmatpush.bf16.msra.mxu0 0
    %382 = vmatpush.bf16.msra.mxu0 0
    %383 = vmatpush.bf16.msra.mxu0 0
    %384 = vmatpush.bf16.msra.mxu0 0
    %385 = vmatpush.bf16.msra.mxu0 %v184
    %386 = vmatpush.bf16.msra.mxu0 %v183
    %387 = vmatmul.bf16.gmra.mxu0 %v377
    %v388 = vpop.f32.mrf.mxu0
    %v389 = vadd.f32 0.0, %v388
    %v390 = vpop.f32.mrf.mxu0
    %391 = vdwg.mxu0
    %v393 = vrot.slane %v389, 2
    %v395 = vadd.f32 %v167, %v393
    %v396 = vxor.u32 %v395, 2147483648
    %v397 = vmul.f32 %v396, 1.442695
    %v398 = vpow.pop %v397
    %v399 = vadd.f32 %v398, 1.0
    %v400 = vrcp.pop %v399
    %v401 = vmul.f32 %v399, %v400
    %v402 = vsub.f32 1.0, %v401
    %v403 = vmul.f32 %v400, %v402
    %v404 = vadd.f32 %v400, %v403
    %vm405 = vweird.f32 %v399
    %vm406 = vweird.f32 %v400
    %vm407 = vmor %vm405, %vm406
    %v408 = vsel %vm407, %v400, %v404
    %v409 = vand.u32 2147483647, %v399
    %vm410 = vcmp.eq.f32.partialorder %v409, 8.507059e+37
    %v411 = vand.u32 %v399, 2147483648
    %v412 = vor.u32 1.1754944e-38, %v411
    %v413 = vsel %vm410, %v412, %v408
    %v414 = vmul.f32 1.0, %v413
    %v415 = vtanh.pop %v395
    %v417 = vrot.slane %v364, 6
    %v419 = vmul.f32 %v414, %v417
    %421 = vrot.lane.b32.xlu0 %v415, 32
    %v422 = vpop.permute.xlu0 %421
    %v424 = vmul.f32 %v414, %v422
    %426 = vrot.lane.b32.xlu0 %v424, 32
    %v427 = vpop.permute.xlu0 %426
    %v429 = vadd.f32 %v419, %v427
    %v430 = vtanh.pop %v429
    %432 = vrot.lane.b32.xlu0 %v430, 32
    %v433 = vpop.permute.xlu0 %432
    %v435 = vmul.f32 %v414, %v433
    %v436 = vpack.c.bf16 %v435, %v435
    %v438 = vrot.slane %v436, 3
    %439 = vrot.lane.b32.xlu0 %v438, 64
    %v440 = vpop.permute.xlu0 %439
    %v442 = vsel %vm187, %v440, 0
    %444 = vmatpush.bf16.msra.mxu0 0
    %445 = vmatpush.bf16.msra.mxu0 0
    %446 = vmatpush.bf16.msra.mxu0 0
    %447 = vmatpush.bf16.msra.mxu0 0
    %448 = vmatpush.bf16.msra.mxu0 0
    %449 = vmatpush.bf16.msra.mxu0 0
    %450 = vmatpush.bf16.msra.mxu0 %v184
    %451 = vmatpush.bf16.msra.mxu0 %v183
    %452 = vmatmul.bf16.gmra.mxu0 %v442
    %v453 = vpop.f32.mrf.mxu0
    %v454 = vadd.f32 0.0, %v453
    %v455 = vpop.f32.mrf.mxu0
    %456 = vdwg.mxu0
    %v457 = vadd.f32 %v169, %v454
    %v458 = vxor.u32 %v457, 2147483648
    %v459 = vmul.f32 %v458, 1.442695
    %v460 = vpow.pop %v459
    %v461 = vadd.f32 %v460, 1.0
    %v462 = vrcp.pop %v461
    %v463 = vmul.f32 %v461, %v462
    %v464 = vsub.f32 1.0, %v463
    %v465 = vmul.f32 %v462, %v464
    %v466 = vadd.f32 %v462, %v465
    %vm467 = vweird.f32 %v461
    %vm468 = vweird.f32 %v462
    %vm469 = vmor %vm467, %vm468
    %v470 = vsel %vm469, %v462, %v466
    %v471 = vand.u32 2147483647, %v461
    %vm472 = vcmp.eq.f32.partialorder %v471, 8.507059e+37
    %v473 = vand.u32 %v461, 2147483648
    %v474 = vor.u32 1.1754944e-38, %v473
    %v475 = vsel %vm472, %v474, %v470
    %v476 = vmul.f32 1.0, %v475
    %v477 = vtanh.pop %v457
    %v479 = vrot.slane %v429, 6
    %v481 = vmul.f32 %v476, %v479
    %483 = vrot.lane.b32.xlu0 %v477, 32
    %v484 = vpop.permute.xlu0 %483
    %v486 = vmul.f32 %v476, %v484
    %488 = vrot.lane.b32.xlu0 %v486, 32
    %v489 = vpop.permute.xlu0 %488
    %v491 = vadd.f32 %v481, %v489
    %v492 = vtanh.pop %v491
    %494 = vrot.lane.b32.xlu0 %v492, 32
    %v495 = vpop.permute.xlu0 %494
    %v497 = vmul.f32 %v476, %v495
    %v498 = vpack.c.bf16 %v497, %v497
    %500 = vrot.lane.b32.xlu0 %v498, 64
    %v501 = vpop.permute.xlu0 %500
    %v503 = vsel %vm187, %v501, 0
    %505 = vmatpush.bf16.msra.mxu0 0
    %506 = vmatpush.bf16.msra.mxu0 0
    %507 = vmatpush.bf16.msra.mxu0 0
    %508 = vmatpush.bf16.msra.mxu0 0
    %509 = vmatpush.bf16.msra.mxu0 0
    %510 = vmatpush.bf16.msra.mxu0 0
    %511 = vmatpush.bf16.msra.mxu0 %v184
    %512 = vmatpush.bf16.msra.mxu0 %v183
    %513 = vmatmul.bf16.gmra.mxu0 %v503
    %v514 = vpop.f32.mrf.mxu0
    %v515 = vadd.f32 0.0, %v514
    %v516 = vpop.f32.mrf.mxu0
    %517 = vdwg.mxu0
    %v519 = vrot.slane %v515, 6
    %v521 = vadd.f32 %v169, %v519
    %v522 = vxor.u32 %v521, 2147483648
    %v523 = vmul.f32 %v522, 1.442695
    %v524 = vpow.pop %v523
    %v525 = vadd.f32 %v524, 1.0
    %v526 = vrcp.pop %v525
    %v527 = vmul.f32 %v525, %v526
    %v528 = vsub.f32 1.0, %v527
    %v529 = vmul.f32 %v526, %v528
    %v530 = vadd.f32 %v526, %v529
    %vm531 = vweird.f32 %v525
    %vm532 = vweird.f32 %v526
    %vm533 = vmor %vm531, %vm532
    %v534 = vsel %vm533, %v526, %v530
    %v535 = vand.u32 2147483647, %v525
    %vm536 = vcmp.eq.f32.partialorder %v535, 8.507059e+37
    %v537 = vand.u32 %v525, 2147483648
    %v538 = vor.u32 1.1754944e-38, %v537
    %v539 = vsel %vm536, %v538, %v534
    %v540 = vmul.f32 1.0, %v539
    %v541 = vtanh.pop %v521
    %v543 = vrot.slane %v491, 6
    %v545 = vmul.f32 %v540, %v543
    %547 = vrot.lane.b32.xlu0 %v541, 32
    %v548 = vpop.permute.xlu0 %547
    %v550 = vmul.f32 %v540, %v548
    %552 = vrot.lane.b32.xlu0 %v550, 32
    %v553 = vpop.permute.xlu0 %552
    %v555 = vadd.f32 %v545, %v553
    %v556 = vtanh.pop %v555
    %558 = vrot.lane.b32.xlu0 %v556, 32
    %v559 = vpop.permute.xlu0 %558
    %v561 = vmul.f32 %v540, %v559
    %v562 = vpack.c.bf16 %v561, %v561
    %v564 = vrot.slane %v562, 1
    %565 = vrot.lane.b32.xlu0 %v564, 64
    %v566 = vpop.permute.xlu0 %565
    %v568 = vsel %vm187, %v566, 0
    %570 = vmatpush.bf16.msra.mxu0 0
    %571 = vmatpush.bf16.msra.mxu0 0
    %572 = vmatpush.bf16.msra.mxu0 0
    %573 = vmatpush.bf16.msra.mxu0 0
    %574 = vmatpush.bf16.msra.mxu0 0
    %575 = vmatpush.bf16.msra.mxu0 0
    %576 = vmatpush.bf16.msra.mxu0 %v184
    %577 = vmatpush.bf16.msra.mxu0 %v183
    %578 = vmatmul.bf16.gmra.mxu0 %v568
    %v579 = vpop.f32.mrf.mxu0
    %v580 = vadd.f32 0.0, %v579
    %v581 = vpop.f32.mrf.mxu0
    %582 = vdwg.mxu0
    %v584 = vrot.slane %v580, 4
    %v586 = vadd.f32 %v169, %v584
    %v587 = vxor.u32 %v586, 2147483648
    %v588 = vmul.f32 %v587, 1.442695
    %v589 = vpow.pop %v588
    %v590 = vadd.f32 %v589, 1.0
    %v591 = vrcp.pop %v590
    %v592 = vmul.f32 %v590, %v591
    %v593 = vsub.f32 1.0, %v592
    %v594 = vmul.f32 %v591, %v593
    %v595 = vadd.f32 %v591, %v594
    %vm596 = vweird.f32 %v590
    %vm597 = vweird.f32 %v591
    %vm598 = vmor %vm596, %vm597
    %v599 = vsel %vm598, %v591, %v595
    %v600 = vand.u32 2147483647, %v590
    %vm601 = vcmp.eq.f32.partialorder %v600, 8.507059e+37
    %v602 = vand.u32 %v590, 2147483648
    %v603 = vor.u32 1.1754944e-38, %v602
    %v604 = vsel %vm601, %v603, %v599
    %v605 = vmul.f32 1.0, %v604
    %v606 = vtanh.pop %v586
    %v608 = vrot.slane %v555, 6
    %v610 = vmul.f32 %v605, %v608
    %612 = vrot.lane.b32.xlu0 %v606, 32
    %v613 = vpop.permute.xlu0 %612
    %v615 = vmul.f32 %v605, %v613
    %617 = vrot.lane.b32.xlu0 %v615, 32
    %v618 = vpop.permute.xlu0 %617
    %v620 = vadd.f32 %v610, %v618
    %v621 = vtanh.pop %v620
    %623 = vrot.lane.b32.xlu0 %v621, 32
    %v624 = vpop.permute.xlu0 %623
    %v626 = vmul.f32 %v605, %v624
    %v627 = vpack.c.bf16 %v626, %v626
    %v629 = vrot.slane %v627, 2
    %630 = vrot.lane.b32.xlu0 %v629, 64
    %v631 = vpop.permute.xlu0 %630
    %v633 = vsel %vm187, %v631, 0
    %635 = vmatpush.bf16.msra.mxu0 0
    %636 = vmatpush.bf16.msra.mxu0 0
    %637 = vmatpush.bf16.msra.mxu0 0
    %638 = vmatpush.bf16.msra.mxu0 0
    %639 = vmatpush.bf16.msra.mxu0 0
    %640 = vmatpush.bf16.msra.mxu0 0
    %641 = vmatpush.bf16.msra.mxu0 %v184
    %642 = vmatpush.bf16.msra.mxu0 %v183
    %643 = vmatmul.bf16.gmra.mxu0 %v633
    %v644 = vpop.f32.mrf.mxu0
    %v645 = vadd.f32 0.0, %v644
    %v646 = vpop.f32.mrf.mxu0
    %647 = vdwg.mxu0
    %v649 = vrot.slane %v645, 2
    %v651 = vadd.f32 %v169, %v649
    %v652 = vxor.u32 %v651, 2147483648
    %v653 = vmul.f32 %v652, 1.442695
    %v654 = vpow.pop %v653
    %v655 = vadd.f32 %v654, 1.0
    %v656 = vrcp.pop %v655
    %v657 = vmul.f32 %v655, %v656
    %v658 = vsub.f32 1.0, %v657
    %v659 = vmul.f32 %v656, %v658
    %v660 = vadd.f32 %v656, %v659
    %vm661 = vweird.f32 %v655
    %vm662 = vweird.f32 %v656
    %vm663 = vmor %vm661, %vm662
    %v664 = vsel %vm663, %v656, %v660
    %v665 = vand.u32 2147483647, %v655
    %vm666 = vcmp.eq.f32.partialorder %v665, 8.507059e+37
    %v667 = vand.u32 %v655, 2147483648
    %v668 = vor.u32 1.1754944e-38, %v667
    %v669 = vsel %vm666, %v668, %v664
    %v670 = vmul.f32 1.0, %v669
    %v671 = vtanh.pop %v651
    %v673 = vrot.slane %v620, 6
    %v675 = vmul.f32 %v670, %v673
    %677 = vrot.lane.b32.xlu0 %v671, 32
    %v678 = vpop.permute.xlu0 %677
    %v680 = vmul.f32 %v670, %v678
    %682 = vrot.lane.b32.xlu0 %v680, 32
    %v683 = vpop.permute.xlu0 %682
    %v685 = vadd.f32 %v675, %v683
    %v686 = vtanh.pop %v685
    %688 = vrot.lane.b32.xlu0 %v686, 32
    %v689 = vpop.permute.xlu0 %688
    %v691 = vmul.f32 %v670, %v689
    %v692 = vpack.c.bf16 %v691, %v691
    %v693 = vld [vmem:[%s4] sm:$0xff]
    %v694 = vld [vmem:[%s4 + $0x8] sm:$0xff]
    %v695 = vld [vmem:[%s4 + $0x10] sm:$0xff]
    %v696 = vld [vmem:[%s4 + $0x18] sm:$0xff]
    %v697 = vld [vmem:[#allocation7] sm:$0x3]
    %v699 = vperm.slane %v697, 0
    %v700 = vperm.slane %v697, 1
    %v704 = vrot.slane %v692, 3
    %705 = vrot.lane.b32.xlu0 %v704, 64
    %v706 = vpop.permute.xlu0 %705
    %v711 = vunpack.c.l.b16 %v693
    %v712 = vunpack.c.h.b16 %v693
    %v713 = vunpack.c.l.b16 %v694
    %v714 = vunpack.c.h.b16 %v694
    %v715 = vunpack.c.l.b16 %v695
    %v716 = vunpack.c.h.b16 %v695
    %v717 = vunpack.c.l.b16 %v696
    %v718 = vunpack.c.h.b16 %v696
    %v719 = vpack.c.b16 %v713, %v711
    %v720 = vpack.c.b16 %v714, %v712
    %v721 = vpack.c.b16 %v717, %v715
    %v722 = vpack.c.b16 %v718, %v716
    %v728 = vsel %vm187, %v706, 0
    %730 = vmatpush.bf16.msra.mxu0 0
    %731 = vmatpush.bf16.msra.mxu0 0
    %732 = vmatpush.bf16.msra.mxu0 0
    %733 = vmatpush.bf16.msra.mxu0 0
    %734 = vmatpush.bf16.msra.mxu0 0
    %735 = vmatpush.bf16.msra.mxu0 0
    %736 = vmatpush.bf16.msra.mxu0 %v721
    %737 = vmatpush.bf16.msra.mxu0 %v719
    %738 = vmatmul.bf16.gmra.mxu0 %v728
    %v739 = vpop.f32.mrf.mxu0
    %v740 = vadd.f32 %v699, %v739
    %v741 = vpop.f32.mrf.mxu0
    %742 = vdwg.mxu0
    %743 = vmatpush.bf16.msra.mxu0 0
    %744 = vmatpush.bf16.msra.mxu0 0
    %745 = vmatpush.bf16.msra.mxu0 0
    %746 = vmatpush.bf16.msra.mxu0 0
    %747 = vmatpush.bf16.msra.mxu0 0
    %748 = vmatpush.bf16.msra.mxu0 0
    %749 = vmatpush.bf16.msra.mxu0 %v722
    %750 = vmatpush.bf16.msra.mxu0 %v720
    %751 = vmatmul.bf16.gmra.mxu0 %v728
    %v752 = vpop.f32.mrf.mxu0
    %v753 = vadd.f32 %v700, %v752
    %v754 = vpop.f32.mrf.mxu0
    %755 = vdwg.mxu0
    %v756 = vmax.f32 %v740, 0.0
    %v757 = vmax.f32 %v753, 0.0
    %v758 = vpack.c.bf16 %v756, %v756
    %v759 = vpack.c.bf16 %v757, %v757
    %v760 = vld [vmem:[#allocation8] sm:$0xff]
    %v761 = vld [vmem:[#allocation8 + $0x8] sm:$0xff]
    %v762 = vld [vmem:[#allocation8 + $0x10] sm:$0xff]
    %v763 = vld [vmem:[#allocation8 + $0x18] sm:$0xff]
    %v764 = vld [vmem:[#allocation8 + $0x20] sm:$0xff]
    %v765 = vld [vmem:[#allocation8 + $0x28] sm:$0xff]
    %v766 = vld [vmem:[#allocation8 + $0x30] sm:$0xff]
    %v767 = vld [vmem:[#allocation8 + $0x38] sm:$0xff]
    %v768 = vld [vmem:[#allocation8 + $0x40] sm:$0xff]
    %v769 = vld [vmem:[#allocation8 + $0x48] sm:$0xff]
    %v770 = vld [vmem:[#allocation8 + $0x50] sm:$0xff]
    %v771 = vld [vmem:[#allocation8 + $0x58] sm:$0xff]
    %v772 = vld [vmem:[#allocation8 + $0x60] sm:$0xff]
    %v773 = vld [vmem:[#allocation8 + $0x68] sm:$0xff]
    %v774 = vld [vmem:[#allocation8 + $0x70] sm:$0xff]
    %v775 = vld [vmem:[#allocation8 + $0x78] sm:$0xff]
    %v776 = vld [vmem:[#allocation8 + $0x80] sm:$0xff]
    %v777 = vld [vmem:[#allocation8 + $0x88] sm:$0xff]
    %v778 = vld [vmem:[#allocation8 + $0x90] sm:$0xff]
    %v779 = vld [vmem:[#allocation8 + $0x98] sm:$0xff]
    %v780 = vld [vmem:[#allocation8 + $0xa0] sm:$0xff]
    %v781 = vld [vmem:[#allocation8 + $0xa8] sm:$0xff]
    %v782 = vld [vmem:[#allocation8 + $0xb0] sm:$0xff]
    %v783 = vld [vmem:[#allocation8 + $0xb8] sm:$0xff]
    %v784 = vld [vmem:[#allocation8 + $0xc0] sm:$0xff]
    %v785 = vld [vmem:[#allocation8 + $0xc8] sm:$0xff]
    %v786 = vld [vmem:[#allocation8 + $0xd0] sm:$0xff]
    %v787 = vld [vmem:[#allocation8 + $0xd8] sm:$0xff]
    %v788 = vld [vmem:[#allocation8 + $0xe0] sm:$0xff]
    %v789 = vld [vmem:[#allocation8 + $0xe8] sm:$0xff]
    %v790 = vld [vmem:[#allocation8 + $0xf0] sm:$0xff]
    %v791 = vld [vmem:[#allocation8 + $0xf8] sm:$0xff]
    %v792 = vld [vmem:[#allocation10] sm:$0x3]
    %v794 = vperm.slane %v792, 0
    %v795 = vperm.slane %v792, 1
    %v830 = vunpack.c.l.b16 %v760
    %v831 = vunpack.c.h.b16 %v760
    %v832 = vunpack.c.l.b16 %v761
    %v833 = vunpack.c.h.b16 %v761
    %v834 = vunpack.c.l.b16 %v762
    %v835 = vunpack.c.h.b16 %v762
    %v836 = vunpack.c.l.b16 %v763
    %v837 = vunpack.c.h.b16 %v763
    %v838 = vunpack.c.l.b16 %v764
    %v839 = vunpack.c.h.b16 %v764
    %v840 = vunpack.c.l.b16 %v765
    %v841 = vunpack.c.h.b16 %v765
    %v842 = vunpack.c.l.b16 %v766
    %v843 = vunpack.c.h.b16 %v766
    %v844 = vunpack.c.l.b16 %v767
    %v845 = vunpack.c.h.b16 %v767
    %v846 = vunpack.c.l.b16 %v768
    %v847 = vunpack.c.h.b16 %v768
    %v848 = vunpack.c.l.b16 %v769
    %v849 = vunpack.c.h.b16 %v769
    %v850 = vunpack.c.l.b16 %v770
    %v851 = vunpack.c.h.b16 %v770
    %v852 = vunpack.c.l.b16 %v771
    %v853 = vunpack.c.h.b16 %v771
    %v854 = vunpack.c.l.b16 %v772
    %v855 = vunpack.c.h.b16 %v772
    %v856 = vunpack.c.l.b16 %v773
    %v857 = vunpack.c.h.b16 %v773
    %v858 = vunpack.c.l.b16 %v774
    %v859 = vunpack.c.h.b16 %v774
    %v860 = vunpack.c.l.b16 %v775
    %v861 = vunpack.c.h.b16 %v775
    %v862 = vunpack.c.l.b16 %v776
    %v863 = vunpack.c.h.b16 %v776
    %v864 = vunpack.c.l.b16 %v777
    %v865 = vunpack.c.h.b16 %v777
    %v866 = vunpack.c.l.b16 %v778
    %v867 = vunpack.c.h.b16 %v778
    %v868 = vunpack.c.l.b16 %v779
    %v869 = vunpack.c.h.b16 %v779
    %v870 = vunpack.c.l.b16 %v780
    %v871 = vunpack.c.h.b16 %v780
    %v872 = vunpack.c.l.b16 %v781
    %v873 = vunpack.c.h.b16 %v781
    %v874 = vunpack.c.l.b16 %v782
    %v875 = vunpack.c.h.b16 %v782
    %v876 = vunpack.c.l.b16 %v783
    %v877 = vunpack.c.h.b16 %v783
    %v878 = vunpack.c.l.b16 %v784
    %v879 = vunpack.c.h.b16 %v784
    %v880 = vunpack.c.l.b16 %v785
    %v881 = vunpack.c.h.b16 %v785
    %v882 = vunpack.c.l.b16 %v786
    %v883 = vunpack.c.h.b16 %v786
    %v884 = vunpack.c.l.b16 %v787
    %v885 = vunpack.c.h.b16 %v787
    %v886 = vunpack.c.l.b16 %v788
    %v887 = vunpack.c.h.b16 %v788
    %v888 = vunpack.c.l.b16 %v789
    %v889 = vunpack.c.h.b16 %v789
    %v890 = vunpack.c.l.b16 %v790
    %v891 = vunpack.c.h.b16 %v790
    %v892 = vunpack.c.l.b16 %v791
    %v893 = vunpack.c.h.b16 %v791
    %v894 = vpack.c.b16 %v832, %v830
    %v895 = vpack.c.b16 %v833, %v831
    %v896 = vpack.c.b16 %v836, %v834
    %v897 = vpack.c.b16 %v837, %v835
    %v898 = vpack.c.b16 %v840, %v838
    %v899 = vpack.c.b16 %v841, %v839
    %v900 = vpack.c.b16 %v844, %v842
    %v901 = vpack.c.b16 %v845, %v843
    %v902 = vpack.c.b16 %v848, %v846
    %v903 = vpack.c.b16 %v849, %v847
    %v904 = vpack.c.b16 %v852, %v850
    %v905 = vpack.c.b16 %v853, %v851
    %v906 = vpack.c.b16 %v856, %v854
    %v907 = vpack.c.b16 %v857, %v855
    %v908 = vpack.c.b16 %v860, %v858
    %v909 = vpack.c.b16 %v861, %v859
    %v910 = vpack.c.b16 %v864, %v862
    %v911 = vpack.c.b16 %v865, %v863
    %v912 = vpack.c.b16 %v868, %v866
    %v913 = vpack.c.b16 %v869, %v867
    %v914 = vpack.c.b16 %v872, %v870
    %v915 = vpack.c.b16 %v873, %v871
    %v916 = vpack.c.b16 %v876, %v874
    %v917 = vpack.c.b16 %v877, %v875
    %v918 = vpack.c.b16 %v880, %v878
    %v919 = vpack.c.b16 %v881, %v879
    %v920 = vpack.c.b16 %v884, %v882
    %v921 = vpack.c.b16 %v885, %v883
    %v922 = vpack.c.b16 %v888, %v886
    %v923 = vpack.c.b16 %v889, %v887
    %v924 = vpack.c.b16 %v892, %v890
    %v925 = vpack.c.b16 %v893, %v891
    %958 = vmatpush.bf16.msra.mxu0 %v908
    %959 = vmatpush.bf16.msra.mxu0 %v906
    %960 = vmatpush.bf16.msra.mxu0 %v904
    %961 = vmatpush.bf16.msra.mxu0 %v902
    %962 = vmatpush.bf16.msra.mxu0 %v900
    %963 = vmatpush.bf16.msra.mxu0 %v898
    %964 = vmatpush.bf16.msra.mxu0 %v896
    %965 = vmatpush.bf16.msra.mxu0 %v894
    %966 = vmatmul.bf16.gmra.mxu0 %v758
    %v967 = vpop.f32.mrf.mxu0
    %v968 = vadd.f32 %v794, %v967
    %v969 = vpop.f32.mrf.mxu0
    %970 = vdwg.mxu0
    %971 = vmatpush.bf16.msra.mxu0 %v924
    %972 = vmatpush.bf16.msra.mxu0 %v922
    %973 = vmatpush.bf16.msra.mxu0 %v920
    %974 = vmatpush.bf16.msra.mxu0 %v918
    %975 = vmatpush.bf16.msra.mxu0 %v916
    %976 = vmatpush.bf16.msra.mxu0 %v914
    %977 = vmatpush.bf16.msra.mxu0 %v912
    %978 = vmatpush.bf16.msra.mxu0 %v910
    %979 = vmatmul.bf16.gmra.mxu0 %v759
    %v980 = vpop.f32.mrf.mxu0
    %v981 = vadd.f32 %v968, %v980
    %v982 = vpop.f32.mrf.mxu0
    %983 = vdwg.mxu0
    %984 = vmatpush.bf16.msra.mxu0 %v909
    %985 = vmatpush.bf16.msra.mxu0 %v907
    %986 = vmatpush.bf16.msra.mxu0 %v905
    %987 = vmatpush.bf16.msra.mxu0 %v903
    %988 = vmatpush.bf16.msra.mxu0 %v901
    %989 = vmatpush.bf16.msra.mxu0 %v899
    %990 = vmatpush.bf16.msra.mxu0 %v897
    %991 = vmatpush.bf16.msra.mxu0 %v895
    %992 = vmatmul.bf16.gmra.mxu0 %v758
    %v993 = vpop.f32.mrf.mxu0
    %v994 = vadd.f32 %v795, %v993
    %v995 = vpop.f32.mrf.mxu0
    %996 = vdwg.mxu0
    %997 = vmatpush.bf16.msra.mxu0 %v925
    %998 = vmatpush.bf16.msra.mxu0 %v923
    %999 = vmatpush.bf16.msra.mxu0 %v921
    %1000 = vmatpush.bf16.msra.mxu0 %v919
    %1001 = vmatpush.bf16.msra.mxu0 %v917
    %1002 = vmatpush.bf16.msra.mxu0 %v915
    %1003 = vmatpush.bf16.msra.mxu0 %v913
    %1004 = vmatpush.bf16.msra.mxu0 %v911
    %1005 = vmatmul.bf16.gmra.mxu0 %v759
    %v1006 = vpop.f32.mrf.mxu0
    %v1007 = vadd.f32 %v994, %v1006
    %v1008 = vpop.f32.mrf.mxu0
    %1009 = vdwg.mxu0
    %v1010 = vmax.f32 %v981, 0.0
    %v1011 = vmax.f32 %v1007, 0.0
    %v1012 = vpack.c.bf16 %v1010, %v1010
    %v1013 = vpack.c.bf16 %v1011, %v1011
    %v1014 = vld [vmem:[#allocation11] sm:$0xf]
    %v1015 = vld [vmem:[#allocation11 + $0x4] sm:$0xf]
    %v1016 = vld [vmem:[#allocation11 + $0x8] sm:$0xf]
    %v1017 = vld [vmem:[#allocation11 + $0xc] sm:$0xf]
    %v1018 = vld [vmem:[#allocation11 + $0x10] sm:$0xf]
    %v1019 = vld [vmem:[#allocation11 + $0x14] sm:$0xf]
    %v1020 = vld [vmem:[#allocation11 + $0x18] sm:$0xf]
    %v1021 = vld [vmem:[#allocation11 + $0x1c] sm:$0xf]
    %v1022 = vld [vmem:[#allocation11 + $0x20] sm:$0xf]
    %v1023 = vld [vmem:[#allocation11 + $0x24] sm:$0xf]
    %v1024 = vld [vmem:[#allocation11 + $0x28] sm:$0xf]
    %v1025 = vld [vmem:[#allocation11 + $0x2c] sm:$0xf]
    %v1026 = vld [vmem:[#allocation11 + $0x30] sm:$0xf]
    %v1027 = vld [vmem:[#allocation11 + $0x34] sm:$0xf]
    %v1028 = vld [vmem:[#allocation11 + $0x38] sm:$0xf]
    %v1029 = vld [vmem:[#allocation11 + $0x3c] sm:$0xf]
    %v1030 = vld [vmem:[#allocation11 + $0x40] sm:$0xf]
    %v1031 = vld [vmem:[#allocation11 + $0x44] sm:$0xf]
    %v1032 = vld [vmem:[#allocation11 + $0x48] sm:$0xf]
    %v1033 = vld [vmem:[#allocation11 + $0x4c] sm:$0xf]
    %v1034 = vld [vmem:[#allocation11 + $0x50] sm:$0xf]
    %v1035 = vld [vmem:[#allocation11 + $0x54] sm:$0xf]
    %v1036 = vld [vmem:[#allocation11 + $0x58] sm:$0xf]
    %v1037 = vld [vmem:[#allocation11 + $0x5c] sm:$0xf]
    %v1038 = vld [vmem:[#allocation11 + $0x60] sm:$0xf]
    %v1039 = vld [vmem:[#allocation11 + $0x64] sm:$0xf]
    %v1040 = vld [vmem:[#allocation11 + $0x68] sm:$0xf]
    %v1041 = vld [vmem:[#allocation11 + $0x6c] sm:$0xf]
    %v1042 = vld [vmem:[#allocation11 + $0x70] sm:$0xf]
    %v1043 = vld [vmem:[#allocation11 + $0x74] sm:$0xf]
    %v1044 = vld [vmem:[#allocation11 + $0x78] sm:$0xf]
    %v1045 = vld [vmem:[#allocation11 + $0x7c] sm:$0xf]
    %v1046 = vld [vmem:[#allocation13] sm:$0x1]
    %v1048 = vperm.slane %v1046, 0
    %v1082 = vunpack.c.l.b16 %v1014
    %v1083 = vunpack.c.l.b16 %v1015
    %v1084 = vunpack.c.l.b16 %v1016
    %v1085 = vunpack.c.l.b16 %v1017
    %v1086 = vunpack.c.l.b16 %v1018
    %v1087 = vunpack.c.l.b16 %v1019
    %v1088 = vunpack.c.l.b16 %v1020
    %v1089 = vunpack.c.l.b16 %v1021
    %v1090 = vunpack.c.l.b16 %v1022
    %v1091 = vunpack.c.l.b16 %v1023
    %v1092 = vunpack.c.l.b16 %v1024
    %v1093 = vunpack.c.l.b16 %v1025
    %v1094 = vunpack.c.l.b16 %v1026
    %v1095 = vunpack.c.l.b16 %v1027
    %v1096 = vunpack.c.l.b16 %v1028
    %v1097 = vunpack.c.l.b16 %v1029
    %v1098 = vunpack.c.l.b16 %v1030
    %v1099 = vunpack.c.l.b16 %v1031
    %v1100 = vunpack.c.l.b16 %v1032
    %v1101 = vunpack.c.l.b16 %v1033
    %v1102 = vunpack.c.l.b16 %v1034
    %v1103 = vunpack.c.l.b16 %v1035
    %v1104 = vunpack.c.l.b16 %v1036
    %v1105 = vunpack.c.l.b16 %v1037
    %v1106 = vunpack.c.l.b16 %v1038
    %v1107 = vunpack.c.l.b16 %v1039
    %v1108 = vunpack.c.l.b16 %v1040
    %v1109 = vunpack.c.l.b16 %v1041
    %v1110 = vunpack.c.l.b16 %v1042
    %v1111 = vunpack.c.l.b16 %v1043
    %v1112 = vunpack.c.l.b16 %v1044
    %v1113 = vunpack.c.l.b16 %v1045
    %v1114 = vpack.c.b16 %v1083, %v1082
    %v1115 = vpack.c.b16 %v1085, %v1084
    %v1116 = vpack.c.b16 %v1087, %v1086
    %v1117 = vpack.c.b16 %v1089, %v1088
    %v1118 = vpack.c.b16 %v1091, %v1090
    %v1119 = vpack.c.b16 %v1093, %v1092
    %v1120 = vpack.c.b16 %v1095, %v1094
    %v1121 = vpack.c.b16 %v1097, %v1096
    %v1122 = vpack.c.b16 %v1099, %v1098
    %v1123 = vpack.c.b16 %v1101, %v1100
    %v1124 = vpack.c.b16 %v1103, %v1102
    %v1125 = vpack.c.b16 %v1105, %v1104
    %v1126 = vpack.c.b16 %v1107, %v1106
    %v1127 = vpack.c.b16 %v1109, %v1108
    %v1128 = vpack.c.b16 %v1111, %v1110
    %v1129 = vpack.c.b16 %v1113, %v1112
    %1146 = vmatpush.bf16.msra.mxu0 %v1121
    %1147 = vmatpush.bf16.msra.mxu0 %v1120
    %1148 = vmatpush.bf16.msra.mxu0 %v1119
    %1149 = vmatpush.bf16.msra.mxu0 %v1118
    %1150 = vmatpush.bf16.msra.mxu0 %v1117
    %1151 = vmatpush.bf16.msra.mxu0 %v1116
    %1152 = vmatpush.bf16.msra.mxu0 %v1115
    %1153 = vmatpush.bf16.msra.mxu0 %v1114
    %1154 = vmatmul.bf16.gmra.mxu0 %v1012
    %v1155 = vpop.f32.mrf.mxu0
    %v1156 = vadd.f32 %v1048, %v1155
    %v1157 = vpop.f32.mrf.mxu0
    %1158 = vdwg.mxu0
    %1159 = vmatpush.bf16.msra.mxu0 %v1129
    %1160 = vmatpush.bf16.msra.mxu0 %v1128
    %1161 = vmatpush.bf16.msra.mxu0 %v1127
    %1162 = vmatpush.bf16.msra.mxu0 %v1126
    %1163 = vmatpush.bf16.msra.mxu0 %v1125
    %1164 = vmatpush.bf16.msra.mxu0 %v1124
    %1165 = vmatpush.bf16.msra.mxu0 %v1123
    %1166 = vmatpush.bf16.msra.mxu0 %v1122
    %1167 = vmatmul.bf16.gmra.mxu0 %v1013
    %v1168 = vpop.f32.mrf.mxu0
    %v1169 = vadd.f32 %v1156, %v1168
    %v1170 = vpop.f32.mrf.mxu0
    %1171 = vdwg.mxu0
    %1172 = vst [vmem:[#allocation14] sm:$0x3] %v1169
    // Predicated region
    $region70: #{lstm_model_forward.1} parent=1 // pred_check
      _
    $region71: #{lstm_model_forward.1} parent=1 // pred_check_branch
      %1174 = sbr.rel (0) target = $region73
    $region72: #{lstm_model_forward.1} parent=1 // pred_region
      %1176 = vsyncadd [#allocation4], 0
      %s1178 = sshll.u32 [#allocation14], 4
      %s1179 = int_to_ptr.vmem [resolvable:$true] %s1178
      %s1180 = sshll.u32 %s10, 4
      %s1181 = int_to_ptr.hbm [resolvable:$true] %s1180
      %1183 = dma.vmem_to_hbm [thread:$0]  %s1179, 32, %s1181, [#allocation4]
    $region73: #{lstm_model_forward.1} parent=1 // pred_fallthru
      _
    // Predicated region
    $region74: #{lstm_model_forward.1} parent=1 // pred_check
      _
    $region75: #{lstm_model_forward.1} parent=1 // pred_check_branch
      %1185 = sbr.rel (0) target = $region77
    $region76: #{lstm_model_forward.1} parent=1 // pred_region
      %1187 = dma.done [#allocation4], 32
    $region77: #{lstm_model_forward.1} parent=1 // pred_fallthru
      _
    %1188 = vsyncpa [#allocation3], 1
    %1189 = vsyncpa [#allocation6], 1
    %1190 = vsyncpa [#allocation9], 1
    %1191 = vsyncpa [#allocation12], 1
    %1192 = vsyncpa [#allocation4], 1

</llo_original>
